<compile_context>
chip_gen: v5e
topology: v5e:2x2
jax: 0.10.0
libtpu: 0.0.40
codegen_flags: <defaults>
</compile_context>

<pallas_src>
import functools

import jax
import jax.numpy as jnp
from jax import lax
from jax.experimental import pallas as pl
from jax.experimental.pallas import tpu as pltpu

# ---- model constants (mirroring the PyTorch module defaults) ----
NUM_DISC_POINTS = 6        # len(SPINAL_DISC_ID)
NUM_DISC_DISEASES = 5      # len(SPINAL_DISC_DISEASE_ID) == Linear out_features
H = W = 64                 # FPN feature map '0' spatial size (maxpool -> 15x15 -> 225)
C_BB = 32                  # synthetic backbone out_channels (real FPN uses 256)
K_PATCH = 9                # im2col patch length (3x3, single channel after channel fold)
HW = H * W                 # 4096
POOL_OUT = 15              # (64 - 8) // 4 + 1
NUM_WINDOWS = POOL_OUT * POOL_OUT   # 225 == Linear in_features


# ---------------------------------------------------------------------------
# pltpu.roll direction probe (run once, outside jit).  The fused kernel uses
# lane rolls to build the 8x8 max-pool windows; this tiny probe pins down the
# shift sign convention on the installed jax/Mosaic so the kernel is correct
# under either convention.
# ---------------------------------------------------------------------------
@functools.lru_cache(maxsize=1)
def _roll_is_numpy() -> bool:
    def probe_kernel(x_ref, o_ref):
        o_ref[...] = pltpu.roll(x_ref[...], 1, 1)

    x = jnp.arange(128, dtype=jnp.float32).reshape(1, 128)
    y = pl.pallas_call(
        probe_kernel,
        out_shape=jax.ShapeDtypeStruct((1, 128), jnp.float32),
    )(x)
    # numpy semantics: roll(x, 1)[1] == x[0] == 0.
    return bool(float(y[0, 1]) == 0.0)


# ---------------------------------------------------------------------------
# Fused kernel.  One grid step processes n_tile images, lane-concatenated.
#   patches_ref : (9, n_tile*4096)  im2col patches (single channel), lane = n*4096 + h*64 + w
#   wbb_ref     : (32, 9)           backbone conv weight, summed over input channels
#   bbb_ref     : (32, 1)           backbone conv bias
#   w1_ref      : (1, 32)           self.conv2d (1x1 conv) weight
#   b1_ref      : (1, 1)            self.conv2d bias
#   m_ref       : (4096, 5)         folded "select pooled positions -> Linear" matrix
#   blin_ref    : (1, 5)            Linear bias
#   out_ref     : (n_tile, 5)       per-image scores
# ---------------------------------------------------------------------------
def fused_kernel(n_tile, roll_numpy,
                 patches_ref, wbb_ref, bbb_ref, w1_ref, b1_ref, m_ref, blin_ref,
                 out_ref):
    lane = n_tile * HW
    x = patches_ref[...]                                                   # (9, lane)

    feat = jnp.dot(wbb_ref[...], x, preferred_element_type=jnp.float32)    # (32, lane)
    feat = jnp.maximum(feat + bbb_ref[...], 0.0)                           # backbone ReLU
    f1 = jnp.dot(w1_ref[...], feat, preferred_element_type=jnp.float32)
    f1 = f1 + b1_ref[...]                                                  # (1, lane)

    # maxpool(8, stride 4): running max over 8 consecutive lanes (width) then over 8 rows
    # (stride 64 lanes), via log-doubling lane rolls.  Wrapped / cross-image lanes only
    # land on positions that are never selected by m_ref, so they are harmless.
    def shift_max(v, s):
        amt = (lane - s) if roll_numpy else s        # == roll by -s toward lower indices
        return jnp.maximum(v, pltpu.roll(v, amt, 1))

    g = shift_max(shift_max(shift_max(f1, 1), 2), 4)          # max over x[p .. p+7]
    r = shift_max(shift_max(shift_max(g, W), 2 * W), 4 * W)   # then over 8 rows below

    # r[n*4096 + 4i*64 + 4j] == pooled[i, j] of image n.  m_ref selects exactly those
    # positions and applies the Linear(225, 5) weights in one matmul per image.
    for n in range(n_tile):
        r_n = r[:, n * HW:(n + 1) * HW]                                    # (1, 4096)
        s_n = jnp.dot(r_n, m_ref[...], preferred_element_type=jnp.float32)  # (1, 5)
        out_ref[pl.ds(n, 1), :] = s_n + blin_ref[...]


def run_fused(patches_tiled, params, n_tile, roll_numpy):
    tiles = patches_tiled.shape[0]
    lane = n_tile * HW
    kernel = functools.partial(fused_kernel, n_tile, roll_numpy)
    return pl.pallas_call(
        kernel,
        out_shape=jax.ShapeDtypeStruct((tiles, n_tile, NUM_DISC_DISEASES), jnp.float32),
        grid=(tiles,),
        in_specs=[
            pl.BlockSpec((None, K_PATCH, lane), lambda i: (i, 0, 0)),
            pl.BlockSpec((C_BB, K_PATCH), lambda i: (0, 0)),
            pl.BlockSpec((C_BB, 1), lambda i: (0, 0)),
            pl.BlockSpec((1, C_BB), lambda i: (0, 0)),
            pl.BlockSpec((1, 1), lambda i: (0, 0)),
            pl.BlockSpec((HW, NUM_DISC_DISEASES), lambda i: (0, 0)),
            pl.BlockSpec((1, NUM_DISC_DISEASES), lambda i: (0, 0)),
        ],
        out_specs=pl.BlockSpec((None, n_tile, NUM_DISC_DISEASES), lambda i: (i, 0, 0)),
        compiler_params=pltpu.CompilerParams(
            dimension_semantics=("parallel",),          # shards tiles across v7x's 2 TCs
            vmem_limit_bytes=32 * 1024 * 1024),
    )(patches_tiled, params["wbb9"], params["bbb"], params["w1"], params["b1"],
      params["m_sel"], params["blin"])


# ---------------------------------------------------------------------------
# Host-side glue (light data rearrangement only).
# ---------------------------------------------------------------------------
def im2col_gray_3x3(x):
    """x: (N, 64, 64) single channel -> (N, 9, 4096); patch index k = dy*3 + dx."""
    n = x.shape[0]
    xp = jnp.pad(x, ((0, 0), (1, 1), (1, 1)))
    cols = [xp[:, dy:dy + H, dx:dx + W] for dy in range(3) for dx in range(3)]
    return jnp.stack(cols, axis=1).reshape(n, K_PATCH, HW)


def cal_scores(x_gray, params, n_tile, roll_numpy):
    """x_gray: (N, 64, 64) -> (N, 5).  Mirrors ClassModel._cal_scores (channels folded)."""
    n = x_gray.shape[0]
    tiles = -(-n // n_tile)
    pad = tiles * n_tile - n
    patches = im2col_gray_3x3(x_gray)                                   # (N, 9, 4096)
    if pad:
        patches = jnp.concatenate(
            [patches, jnp.zeros((pad, K_PATCH, HW), patches.dtype)], axis=0)
    patches = patches.reshape(tiles, n_tile, K_PATCH, HW)
    patches = patches.transpose(0, 2, 1, 3).reshape(tiles, K_PATCH, n_tile * HW)
    scores = run_fused(patches, params, n_tile, roll_numpy)             # (tiles, n_tile, 5)
    return scores.reshape(tiles * n_tile, NUM_DISC_DISEASES)[:n]


@functools.partial(jax.jit, static_argnames=("n_tile", "roll_numpy"))
def _forward_impl(images, params, *, n_tile, roll_numpy):
    b, p = images.shape[0], images.shape[1]
    # PyTorch expands the grayscale image to 3 identical channels; that broadcast is folded
    # exactly into the channel-summed backbone weight, so we feed the single channel.
    x = images[:, :, 0, 0].reshape(b * p, H, W).astype(jnp.float32)
    raw = cal_scores(x, params, n_tile, roll_numpy).reshape(b, p, NUM_DISC_DISEASES)

    # Eval branch: scores[i, argmax] = 1.  Like the PyTorch loop, every batch element's argmax
    # for disc i writes into the same row (rows can hold multiple ones when B > 1).
    idx = jnp.argmax(raw, axis=-1)                                      # (B, P)
    onehot = jax.nn.one_hot(idx, NUM_DISC_DISEASES, dtype=jnp.float32)  # (B, P, 5)
    out = jnp.max(onehot, axis=0)                                       # (P, 5)
    return out, raw


def class_model_forward(images, params, n_tile=None):
    """Eval branch of ClassModel.forward.

    images: (B, num_disc, 1, 1, 64, 64) grayscale transverse images.
    Returns (scores_onehot (num_disc, 5), raw per-image scores (B, num_disc, 5)).
    pixel_mean / pixel_std buffers exist in the module but are never applied in forward.
    """
    n = images.shape[0] * images.shape[1]
    if n_tile is None:
        n_tile = min(8, max(1, (n + 1) // 2))   # ~2 grid steps, capped images per block
    return _forward_impl(images, params, n_tile=n_tile, roll_numpy=_roll_is_numpy())


# ---------------------------------------------------------------------------
# Pure-JAX reference (lax.conv / lax.reduce_window) for a correctness check.
# ---------------------------------------------------------------------------
def reference_scores(x_gray, wbb4, bbb, w1, b1, wlin, blin):
    n = x_gray.shape[0]
    imgs = jnp.broadcast_to(x_gray[:, None], (n, 3, H, W))
    feat = lax.conv_general_dilated(
        imgs, wbb4, window_strides=(1, 1), padding=((1, 1), (1, 1)),
        dimension_numbers=("NCHW", "OIHW", "NCHW"))
    feat = jnp.maximum(feat + bbb.reshape(1, C_BB, 1, 1), 0.0)
    f1 = jnp.einsum("oc,nchw->nohw", w1, feat) + b1.reshape(1, 1, 1, 1)
    pooled = lax.reduce_window(f1, -jnp.inf, lax.max,
                               window_dimensions=(1, 1, 8, 8),
                               window_strides=(1, 1, 4, 4), padding="VALID")
    flat = pooled.reshape(n, NUM_WINDOWS)
    return jnp.dot(flat, wlin.T) + blin


def make_params(key):
    k = jax.random.split(key, 6)
    wbb4 = jax.random.normal(k[0], (C_BB, 3, 3, 3), jnp.float32) * 0.2
    bbb = jax.random.normal(k[1], (C_BB,), jnp.float32) * 0.1
    w1 = jax.random.normal(k[2], (1, C_BB), jnp.float32) * 0.2          # conv2d 1x1 weight
    b1 = jax.random.normal(k[3], (1,), jnp.float32) * 0.1
    wlin = jax.random.normal(k[4], (NUM_DISC_DISEASES, NUM_WINDOWS), jnp.float32) * 0.05
    blin = jax.random.normal(k[5], (NUM_DISC_DISEASES,), jnp.float32) * 0.1

    # Fold "select pooled positions" + Linear: M[4i*64 + 4j, :] = wlin[:, i*15 + j], else 0.
    ij = jnp.arange(POOL_OUT)
    rows = (4 * ij[:, None] * W + 4 * ij[None, :]).reshape(-1)           # (225,)
    m_sel = jnp.zeros((HW, NUM_DISC_DISEASES), jnp.float32).at[rows].set(wlin.T)

    params = dict(
        wbb9=wbb4.sum(axis=1).reshape(C_BB, K_PATCH),   # grayscale channel fold (exact)
        bbb=bbb.reshape(C_BB, 1),
        w1=w1,
        b1=b1.reshape(1, 1),
        m_sel=m_sel,
        blin=blin.reshape(1, NUM_DISC_DISEASES),
    )
    return params, wbb4, bbb, w1, b1, wlin, blin


if __name__ == "__main__":
    key = jax.random.PRNGKey(0)
    pkey, xkey = jax.random.split(key)
    params, wbb4, bbb_v, w1_v, b1_v, wlin_v, blin_v = make_params(pkey)

    batch = 2
    images = jax.random.uniform(
        xkey, (batch, NUM_DISC_POINTS, 1, 1, H, W), jnp.float32)

    onehot, raw = class_model_forward(images, params)
    onehot, raw = jax.block_until_ready((onehot, raw))

    # Cross-check the per-image scores against a pure-JAX reference.
    x_gray = images[:, :, 0, 0].reshape(batch * NUM_DISC_POINTS, H, W)
    ref = reference_scores(x_gray, wbb4, bbb_v, w1_v, b1_v, wlin_v, blin_v)
    ref = ref.reshape(batch, NUM_DISC_POINTS, NUM_DISC_DISEASES)
    max_err = float(jnp.max(jnp.abs(raw - ref)))
    assert jnp.allclose(raw, ref, atol=5e-2, rtol=5e-2), (
        "mismatch vs reference: max abs err = %g" % max_err)
    assert onehot.shape == (NUM_DISC_POINTS, NUM_DISC_DISEASES)

    print("KERNEL_OK")
</pallas_src>

<mosaic_0001>
module attributes {stable_mosaic.version = 11 : i64} {
  func.func @probe_kernel(%arg0: memref<1x128xf32, #tpu.memory_space<vmem>>, %arg1: memref<1x128xf32, #tpu.memory_space<vmem>>) attributes {dimension_semantics = [], scalar_prefetch = 0 : i64, scratch_operands = 0 : i64, tpu.core_type = #tpu.core_type<tc>} {
    %c0 = arith.constant 0 : index
    %c0_0 = arith.constant 0 : index
    %0 = vector.load %arg0[%c0, %c0_0] : memref<1x128xf32, #tpu.memory_space<vmem>>, vector<1x128xf32>
    %c1_i32 = arith.constant 1 : i32
    %1 = tpu.dynamic_rotate %0 by %c1_i32 dim 1 : vector<1x128xf32>, i32 -> vector<1x128xf32>
    %c0_1 = arith.constant 0 : index
    %c0_2 = arith.constant 0 : index
    %2 = vector.load %arg1[%c0_1, %c0_2] : memref<1x128xf32, #tpu.memory_space<vmem>>, vector<1x128xf32>
    tpu.vector_store %arg1[%c0_1, %c0_2], %1 {strides = array<i32>} : memref<1x128xf32, #tpu.memory_space<vmem>>, vector<1x128xf32>,
    return
  }
}

</mosaic_0001>

<llo_original>
// kernel: tpu_custom_call.1
$region0: #{tpu_custom_call.1}
  #allocation0 [shape = 'u32[]', space=smem, size = 0x4, offset = 0x4, fixed_abs, tag = 'smem constant byte address 0x4 - core index']
  #allocation1 [shape = 'u32[72,128]{1,0:T(1,128)}', space=vmem, size = 0x9000, scoped, tag = 'internal scratch']
  %s0 = inlined_call_operand.hbm [shape: f32[1,128], index: 0, kind: input, shape index: {}]
  %s1 = inlined_call_operand.hbm [shape: f32[1,128], index: 1, kind: output, shape index: {}]
  %s2 = sld [smem:[#allocation0]]
  $region18: #{tpu_custom_call.1} parent=0
    _
  %s4 = ssub.s32 1, %s2
  %s5 = scalar_select 0, %s4, %s2
  $region1: #{tpu_custom_call.1} parent=0
    #allocation2 [shape = 'u8[512]{0}', space=vmem, size = 0x400, scoped, tag = 'input window, operand 0, single buffered']
    #allocation3 [shape = 's32[1]{0}', space=sflag, size = 0x4, scoped, tag = 'scoped memory for tpu_custom_call.1']
    #allocation4 [shape = 's32[1]{0}', space=sflag, size = 0x4, scoped, tag = 'scoped memory for tpu_custom_call.1']
    #allocation5 [shape = 'u8[512]{0}', space=vmem, size = 0x400, scoped, tag = 'output window, operand 0, single buffered']
    %6 = vsyncpa [#allocation3], 0
    %7 = vsyncpa [#allocation4], 0
    // Predicated region
    $region2: #{tpu_custom_call.1} parent=1 // pred_check
      _
    $region3: #{tpu_custom_call.1} parent=1 // pred_check_branch
      %9 = sbr.rel (0) target = $region5
    $region4: #{tpu_custom_call.1} parent=1 // pred_region
      %11 = vsyncadd [#allocation3], 0
      %s13 = sshll.u32 %s0, 4
      %s14 = int_to_ptr.hbm [resolvable:$true] %s13
      %s15 = sshll.u32 [#allocation2], 4
      %s16 = int_to_ptr.vmem [resolvable:$true] %s15
      %18 = dma.hbm_to_vmem [thread:$0]  %s14, 16, %s16, [#allocation3]
    $region5: #{tpu_custom_call.1} parent=1 // pred_fallthru
      _
    // Predicated region
    $region6: #{tpu_custom_call.1} parent=1 // pred_check
      _
    $region7: #{tpu_custom_call.1} parent=1 // pred_check_branch
      %20 = sbr.rel (0) target = $region9
    $region8: #{tpu_custom_call.1} parent=1 // pred_region
      %22 = dma.done [#allocation3], 16
    $region9: #{tpu_custom_call.1} parent=1 // pred_fallthru
      _
    %v23 = vld [vmem:[#allocation2] sm:$0x1]
    %24 = vrot.lane.b32.xlu0 %v23, 1
    %v25 = vpop.permute.xlu0 %24
    %26 = vst [vmem:[#allocation5] sm:$0x1] %v25
    // Predicated region
    $region10: #{tpu_custom_call.1} parent=1 // pred_check
      _
    $region11: #{tpu_custom_call.1} parent=1 // pred_check_branch
      %28 = sbr.rel (0) target = $region13
    $region12: #{tpu_custom_call.1} parent=1 // pred_region
      %30 = vsyncadd [#allocation4], 0
      %s32 = sshll.u32 [#allocation5], 4
      %s33 = int_to_ptr.vmem [resolvable:$true] %s32
      %s34 = sshll.u32 %s1, 4
      %s35 = int_to_ptr.hbm [resolvable:$true] %s34
      %37 = dma.vmem_to_hbm [thread:$0]  %s33, 16, %s35, [#allocation4]
    $region13: #{tpu_custom_call.1} parent=1 // pred_fallthru
      _
    // Predicated region
    $region14: #{tpu_custom_call.1} parent=1 // pred_check
      _
    $region15: #{tpu_custom_call.1} parent=1 // pred_check_branch
      %39 = sbr.rel (0) target = $region17
    $region16: #{tpu_custom_call.1} parent=1 // pred_region
      %41 = dma.done [#allocation4], 16
    $region17: #{tpu_custom_call.1} parent=1 // pred_fallthru
      _
    %42 = vsyncpa [#allocation3], 1
    %43 = vsyncpa [#allocation4], 1

</llo_original>
